<compile_context>
chip_gen: v7x
topology: tpu7x:2x2x1
jax: 0.10.0
libtpu: 0.0.40
codegen_flags: <defaults>
</compile_context>

<pallas_src>
import jax
import jax.numpy as jnp
from jax import lax
from jax.experimental import pallas as pl
from jax.experimental.pallas import tpu as pltpu


def _lstm_fused_kernel(x_ref, wih_ref, whh_ref, bih_ref, bhh_ref, out_ref, xw_ref):
    """Fused input projection + serial LSTM recurrence; emits final hidden state.

    x_ref:   (seq_len, obs_dim)  VMEM  -- observation history
    wih_ref: (4H, obs_dim)       VMEM  -- W_ih, PyTorch layout
    whh_ref: (4H, H)             VMEM  -- W_hh, PyTorch layout
    bih_ref: (1, 4H)             VMEM
    bhh_ref: (1, 4H)             VMEM
    out_ref: (1, H)              VMEM  -- final hidden state h_T
    xw_ref:  (seq_len, 4H)       VMEM scratch -- x @ W_ih^T + (b_ih + b_hh)
    """
    H = out_ref.shape[-1]
    seq_len = x_ref.shape[0]
    four_h = 4 * H

    # --- one-time work (off the recurrent critical path) -------------------
    # Bias combine: single VPU add, done once per call.
    b = bih_ref[...] + bhh_ref[...]                                   # (1, 4H)

    # Input projection for ALL timesteps in one MXU pass. W_ih^T is folded
    # into the dot_general dimension numbers (contract dim 1 of both sides),
    # so no transpose op exists anywhere in wrapper or kernel.
    nt_dims = (((1,), (1,)), ((), ()))
    xw_ref[...] = (
        lax.dot_general(
            x_ref[...], wih_ref[...], nt_dims,
            preferred_element_type=jnp.float32,
        )
        + b
    )                                                                  # (S, 4H)

    # Hoist the recurrent weight load out of the loop; it stays in vregs
    # across all (unrolled) timesteps. PyTorch layout (4H, H); the transpose
    # is again folded into the per-step dot_general dimension numbers.
    whh = whh_ref[...]                                                 # (4H, H)

    # Constant gate pre-scale, hoisted: 0.5 for i/f/o columns, 1.0 for the g
    # columns, so a single tanh over the full 4H vreg gives both
    # sigmoid(z) = 0.5*tanh(z/2)+0.5 (i/f/o) and tanh(g) (g columns).
    col = lax.broadcasted_iota(jnp.int32, (1, four_h), 1)
    is_g = (col >= 2 * H) & (col < 3 * H)
    half_scale = jnp.where(is_g, jnp.float32(1.0), jnp.float32(0.5))  # (1, 4H)

    # --- serial recurrence --------------------------------------------------
    def step(t, carry):
        h, c = carry
        # Recurrent projection: (1, H) x (4H, H)^T -> (1, 4H) on the MXU.
        gates = xw_ref[pl.ds(t, 1), :] + lax.dot_general(
            h, whh, nt_dims, preferred_element_type=jnp.float32
        )
        # Single EUP tanh over the full 4H-wide gates vreg (push #1).
        t_all = jnp.tanh(gates * half_scale)
        i_g = 0.5 * t_all[:, 0 * H:1 * H] + 0.5     # sigmoid(i)
        f_g = 0.5 * t_all[:, 1 * H:2 * H] + 0.5     # sigmoid(f)
        g_g = t_all[:, 2 * H:3 * H]                 # tanh(g)
        o_g = 0.5 * t_all[:, 3 * H:4 * H] + 0.5     # sigmoid(o)
        c_new = f_g * c + i_g * g_g
        h_new = o_g * jnp.tanh(c_new)               # EUP push #2
        return (h_new, c_new)

    h0 = jnp.zeros((1, H), jnp.float32)
    c0 = jnp.zeros((1, H), jnp.float32)
    # seq_len is static and small: fully unroll so adjacent steps' VMEM loads,
    # MXU pushes and EUP pushes can interleave. (Switch to unroll=2..4 if the
    # history ever gets long, per review.)
    h_final, _ = lax.fori_loop(0, seq_len, step, (h0, c0), unroll=True)
    out_ref[...] = h_final


def lstm_history_encoder(history, w_ih, w_hh, b_ih, b_hh):
    """history: [seq_len, input_size] float32.
    w_ih: [4H, input_size], w_hh: [4H, H], b_ih/b_hh: [4H]   (PyTorch layout).
    Returns: [H] — final hidden state (== lstm(history)[0][-1]).
    """
    seq_len, input_size = history.shape
    four_h, H = w_hh.shape

    x = jnp.asarray(history, jnp.float32)
    wih = jnp.asarray(w_ih, jnp.float32)                     # (4H, obs) — PyTorch layout
    whh = jnp.asarray(w_hh, jnp.float32)                     # (4H, H)   — PyTorch layout
    bih = jnp.asarray(b_ih, jnp.float32).reshape(1, four_h)  # layout-free reshape only
    bhh = jnp.asarray(b_hh, jnp.float32).reshape(1, four_h)

    out = pl.pallas_call(
        _lstm_fused_kernel,
        out_shape=jax.ShapeDtypeStruct((1, H), jnp.float32),
        in_specs=[
            pl.BlockSpec((seq_len, input_size), lambda: (0, 0)),
            pl.BlockSpec((four_h, input_size), lambda: (0, 0)),
            pl.BlockSpec((four_h, H), lambda: (0, 0)),
            pl.BlockSpec((1, four_h), lambda: (0, 0)),
            pl.BlockSpec((1, four_h), lambda: (0, 0)),
        ],
        out_specs=pl.BlockSpec((1, H), lambda: (0, 0)),
        scratch_shapes=[pltpu.VMEM((seq_len, four_h), jnp.float32)],
    )(x, wih, whh, bih, bhh)
    return out[0]


def _reference_lstm(history, w_ih, w_hh, b_ih, b_hh):
    """Pure-JAX reference matching torch.nn.LSTM forward (unbatched)."""
    H = w_hh.shape[1]

    def step(carry, x_t):
        h, c = carry
        gates = x_t @ w_ih.T + b_ih + h @ w_hh.T + b_hh
        i_g = jax.nn.sigmoid(gates[0 * H:1 * H])
        f_g = jax.nn.sigmoid(gates[1 * H:2 * H])
        g_g = jnp.tanh(gates[2 * H:3 * H])
        o_g = jax.nn.sigmoid(gates[3 * H:4 * H])
        c_new = f_g * c + i_g * g_g
        h_new = o_g * jnp.tanh(c_new)
        return (h_new, c_new), h_new

    (h_fin, _), _ = jax.lax.scan(step, (jnp.zeros(H), jnp.zeros(H)), history)
    return h_fin


if __name__ == "__main__":
    # Small shapes consistent with the module: observation_shape=(16,), latent_dim=32.
    seq_len, obs_dim, latent_dim = 8, 16, 32
    key = jax.random.PRNGKey(0)
    k0, k1, k2, k3, k4 = jax.random.split(key, 5)

    # Deterministic parameter init (PyTorch-style U(-1/sqrt(H), 1/sqrt(H))).
    bound = 1.0 / (latent_dim ** 0.5)
    w_ih = jax.random.uniform(k1, (4 * latent_dim, obs_dim), jnp.float32, -bound, bound)
    w_hh = jax.random.uniform(k2, (4 * latent_dim, latent_dim), jnp.float32, -bound, bound)
    b_ih = jax.random.uniform(k3, (4 * latent_dim,), jnp.float32, -bound, bound)
    b_hh = jax.random.uniform(k4, (4 * latent_dim,), jnp.float32, -bound, bound)

    history = jax.random.normal(k0, (seq_len, obs_dim), jnp.float32)

    out = lstm_history_encoder(history, w_ih, w_hh, b_ih, b_hh)
    out = jax.block_until_ready(out)

    ref = jax.block_until_ready(_reference_lstm(history, w_ih, w_hh, b_ih, b_hh))
    assert out.shape == (latent_dim,)
    assert jnp.allclose(out, ref, atol=1e-5, rtol=1e-5), "mismatch vs pure-JAX LSTM reference"

    print("KERNEL_OK")
</pallas_src>

<mosaic_0001>
module attributes {stable_mosaic.version = 11 : i64} {
  func.func @_lstm_fused_kernel(%arg0: memref<8x16xf32, #tpu.memory_space<vmem>>, %arg1: memref<128x16xf32, #tpu.memory_space<vmem>>, %arg2: memref<128x32xf32, #tpu.memory_space<vmem>>, %arg3: memref<1x128xf32, #tpu.memory_space<vmem>>, %arg4: memref<1x128xf32, #tpu.memory_space<vmem>>, %arg5: memref<1x32xf32, #tpu.memory_space<vmem>>, %arg6: memref<8x128xf32, #tpu.memory_space<vmem>>) attributes {dimension_semantics = [], scalar_prefetch = 0 : i64, scratch_operands = 1 : i64, tpu.core_type = #tpu.core_type<tc>} {
    %c0 = arith.constant 0 : index
    %c0_0 = arith.constant 0 : index
    %0 = vector.load %arg3[%c0, %c0_0] : memref<1x128xf32, #tpu.memory_space<vmem>>, vector<1x128xf32>
    %c0_1 = arith.constant 0 : index
    %c0_2 = arith.constant 0 : index
    %1 = vector.load %arg4[%c0_1, %c0_2] : memref<1x128xf32, #tpu.memory_space<vmem>>, vector<1x128xf32>
    %2 = arith.addf %0, %1 : vector<1x128xf32>
    %c0_3 = arith.constant 0 : index
    %c0_4 = arith.constant 0 : index
    %3 = vector.load %arg0[%c0_3, %c0_4] : memref<8x16xf32, #tpu.memory_space<vmem>>, vector<8x16xf32>
    %c0_5 = arith.constant 0 : index
    %c0_6 = arith.constant 0 : index
    %4 = vector.load %arg1[%c0_5, %c0_6] : memref<128x16xf32, #tpu.memory_space<vmem>>, vector<128x16xf32>
    %cst = arith.constant dense<0.000000e+00> : vector<8x128xf32>
    %5 = tpu.matmul %3, %4, %cst {dimension_numbers = #tpu.dot_dimension_numbers<[1], [1], [0], [0], [0, 0, 1, 0], [], []>} : vector<8x16xf32>, vector<128x16xf32>, vector<8x128xf32> -> vector<8x128xf32>
    %6 = vector.broadcast %2 : vector<1x128xf32> to vector<8x128xf32>
    %7 = arith.addf %5, %6 : vector<8x128xf32>
    %c0_7 = arith.constant 0 : index
    %c0_8 = arith.constant 0 : index
    %8 = vector.load %arg6[%c0_7, %c0_8] : memref<8x128xf32, #tpu.memory_space<vmem>>, vector<8x128xf32>
    tpu.vector_store %arg6[%c0_7, %c0_8], %7 {strides = array<i32>} : memref<8x128xf32, #tpu.memory_space<vmem>>, vector<8x128xf32>,
    %c0_9 = arith.constant 0 : index
    %c0_10 = arith.constant 0 : index
    %9 = vector.load %arg2[%c0_9, %c0_10] : memref<128x32xf32, #tpu.memory_space<vmem>>, vector<128x32xf32>
    %10 = tpu.iota {dimensions = array<i32: 1>} : vector<1x128xi32>
    %c64_i32 = arith.constant 64 : i32
    %11 = vector.broadcast %c64_i32 : i32 to vector<1x128xi32>
    %12 = arith.cmpi sge, %10, %11 : vector<1x128xi32>
    %c96_i32 = arith.constant 96 : i32
    %13 = vector.broadcast %c96_i32 : i32 to vector<1x128xi32>
    %14 = arith.cmpi slt, %10, %13 : vector<1x128xi32>
    %15 = arith.andi %12, %14 : vector<1x128xi1>
    %cst_11 = arith.constant 1.000000e+00 : f32
    %cst_12 = arith.constant 5.000000e-01 : f32
    %16 = vector.broadcast %cst_11 : f32 to vector<1x128xf32>
    %17 = vector.broadcast %cst_12 : f32 to vector<1x128xf32>
    %18 = arith.select %15, %16, %17 : vector<1x128xi1>, vector<1x128xf32>
    %cst_13 = arith.constant 0.000000e+00 : f32
    %19 = vector.broadcast %cst_13 : f32 to vector<1x32xf32>
    %cst_14 = arith.constant 0.000000e+00 : f32
    %20 = vector.broadcast %cst_14 : f32 to vector<1x32xf32>
    %c0_i32 = arith.constant 0 : i32
    %21 = arith.index_cast %c0_i32 : i32 to index
    %c0_15 = arith.constant 0 : index
    %22 = vector.load %arg6[%21, %c0_15] : memref<8x128xf32, #tpu.memory_space<vmem>>, vector<1x128xf32>
    %cst_16 = arith.constant dense<0.000000e+00> : vector<1x128xf32>
    %23 = tpu.matmul %19, %9, %cst_16 {dimension_numbers = #tpu.dot_dimension_numbers<[1], [1], [0], [0], [0, 0, 1, 0], [], []>} : vector<1x32xf32>, vector<128x32xf32>, vector<1x128xf32> -> vector<1x128xf32>
    %24 = arith.addf %22, %23 : vector<1x128xf32>
    %25 = arith.mulf %24, %18 : vector<1x128xf32>
    %26 = math.tanh %25 : vector<1x128xf32>
    %27 = vector.extract_strided_slice %26 {offsets = [0, 0], sizes = [1, 32], strides = [1, 1]} : vector<1x128xf32> to vector<1x32xf32>
    %cst_17 = arith.constant 5.000000e-01 : f32
    %28 = vector.broadcast %cst_17 : f32 to vector<1x32xf32>
    %29 = arith.mulf %28, %27 : vector<1x32xf32>
    %cst_18 = arith.constant 5.000000e-01 : f32
    %30 = vector.broadcast %cst_18 : f32 to vector<1x32xf32>
    %31 = arith.addf %29, %30 : vector<1x32xf32>
    %32 = vector.extract_strided_slice %26 {offsets = [0, 32], sizes = [1, 32], strides = [1, 1]} : vector<1x128xf32> to vector<1x32xf32>
    %cst_19 = arith.constant 5.000000e-01 : f32
    %33 = vector.broadcast %cst_19 : f32 to vector<1x32xf32>
    %34 = arith.mulf %33, %32 : vector<1x32xf32>
    %cst_20 = arith.constant 5.000000e-01 : f32
    %35 = vector.broadcast %cst_20 : f32 to vector<1x32xf32>
    %36 = arith.addf %34, %35 : vector<1x32xf32>
    %37 = vector.extract_strided_slice %26 {offsets = [0, 64], sizes = [1, 32], strides = [1, 1]} : vector<1x128xf32> to vector<1x32xf32>
    %38 = vector.extract_strided_slice %26 {offsets = [0, 96], sizes = [1, 32], strides = [1, 1]} : vector<1x128xf32> to vector<1x32xf32>
    %cst_21 = arith.constant 5.000000e-01 : f32
    %39 = vector.broadcast %cst_21 : f32 to vector<1x32xf32>
    %40 = arith.mulf %39, %38 : vector<1x32xf32>
    %cst_22 = arith.constant 5.000000e-01 : f32
    %41 = vector.broadcast %cst_22 : f32 to vector<1x32xf32>
    %42 = arith.addf %40, %41 : vector<1x32xf32>
    %43 = arith.mulf %36, %20 : vector<1x32xf32>
    %44 = arith.mulf %31, %37 : vector<1x32xf32>
    %45 = arith.addf %43, %44 : vector<1x32xf32>
    %46 = math.tanh %45 : vector<1x32xf32>
    %47 = arith.mulf %42, %46 : vector<1x32xf32>
    %c1_i32 = arith.constant 1 : i32
    %48 = arith.index_cast %c1_i32 : i32 to index
    %c0_23 = arith.constant 0 : index
    %49 = vector.load %arg6[%48, %c0_23] : memref<8x128xf32, #tpu.memory_space<vmem>>, vector<1x128xf32>
    %cst_24 = arith.constant dense<0.000000e+00> : vector<1x128xf32>
    %50 = tpu.matmul %47, %9, %cst_24 {dimension_numbers = #tpu.dot_dimension_numbers<[1], [1], [0], [0], [0, 0, 1, 0], [], []>} : vector<1x32xf32>, vector<128x32xf32>, vector<1x128xf32> -> vector<1x128xf32>
    %51 = arith.addf %49, %50 : vector<1x128xf32>
    %52 = arith.mulf %51, %18 : vector<1x128xf32>
    %53 = math.tanh %52 : vector<1x128xf32>
    %54 = vector.extract_strided_slice %53 {offsets = [0, 0], sizes = [1, 32], strides = [1, 1]} : vector<1x128xf32> to vector<1x32xf32>
    %cst_25 = arith.constant 5.000000e-01 : f32
    %55 = vector.broadcast %cst_25 : f32 to vector<1x32xf32>
    %56 = arith.mulf %55, %54 : vector<1x32xf32>
    %cst_26 = arith.constant 5.000000e-01 : f32
    %57 = vector.broadcast %cst_26 : f32 to vector<1x32xf32>
    %58 = arith.addf %56, %57 : vector<1x32xf32>
    %59 = vector.extract_strided_slice %53 {offsets = [0, 32], sizes = [1, 32], strides = [1, 1]} : vector<1x128xf32> to vector<1x32xf32>
    %cst_27 = arith.constant 5.000000e-01 : f32
    %60 = vector.broadcast %cst_27 : f32 to vector<1x32xf32>
    %61 = arith.mulf %60, %59 : vector<1x32xf32>
    %cst_28 = arith.constant 5.000000e-01 : f32
    %62 = vector.broadcast %cst_28 : f32 to vector<1x32xf32>
    %63 = arith.addf %61, %62 : vector<1x32xf32>
    %64 = vector.extract_strided_slice %53 {offsets = [0, 64], sizes = [1, 32], strides = [1, 1]} : vector<1x128xf32> to vector<1x32xf32>
    %65 = vector.extract_strided_slice %53 {offsets = [0, 96], sizes = [1, 32], strides = [1, 1]} : vector<1x128xf32> to vector<1x32xf32>
    %cst_29 = arith.constant 5.000000e-01 : f32
    %66 = vector.broadcast %cst_29 : f32 to vector<1x32xf32>
    %67 = arith.mulf %66, %65 : vector<1x32xf32>
    %cst_30 = arith.constant 5.000000e-01 : f32
    %68 = vector.broadcast %cst_30 : f32 to vector<1x32xf32>
    %69 = arith.addf %67, %68 : vector<1x32xf32>
    %70 = arith.mulf %63, %45 : vector<1x32xf32>
    %71 = arith.mulf %58, %64 : vector<1x32xf32>
    %72 = arith.addf %70, %71 : vector<1x32xf32>
    %73 = math.tanh %72 : vector<1x32xf32>
    %74 = arith.mulf %69, %73 : vector<1x32xf32>
    %c2_i32 = arith.constant 2 : i32
    %75 = arith.index_cast %c2_i32 : i32 to index
    %c0_31 = arith.constant 0 : index
    %76 = vector.load %arg6[%75, %c0_31] : memref<8x128xf32, #tpu.memory_space<vmem>>, vector<1x128xf32>
    %cst_32 = arith.constant dense<0.000000e+00> : vector<1x128xf32>
    %77 = tpu.matmul %74, %9, %cst_32 {dimension_numbers = #tpu.dot_dimension_numbers<[1], [1], [0], [0], [0, 0, 1, 0], [], []>} : vector<1x32xf32>, vector<128x32xf32>, vector<1x128xf32> -> vector<1x128xf32>
    %78 = arith.addf %76, %77 : vector<1x128xf32>
    %79 = arith.mulf %78, %18 : vector<1x128xf32>
    %80 = math.tanh %79 : vector<1x128xf32>
    %81 = vector.extract_strided_slice %80 {offsets = [0, 0], sizes = [1, 32], strides = [1, 1]} : vector<1x128xf32> to vector<1x32xf32>
    %cst_33 = arith.constant 5.000000e-01 : f32
    %82 = vector.broadcast %cst_33 : f32 to vector<1x32xf32>
    %83 = arith.mulf %82, %81 : vector<1x32xf32>
    %cst_34 = arith.constant 5.000000e-01 : f32
    %84 = vector.broadcast %cst_34 : f32 to vector<1x32xf32>
    %85 = arith.addf %83, %84 : vector<1x32xf32>
    %86 = vector.extract_strided_slice %80 {offsets = [0, 32], sizes = [1, 32], strides = [1, 1]} : vector<1x128xf32> to vector<1x32xf32>
    %cst_35 = arith.constant 5.000000e-01 : f32
    %87 = vector.broadcast %cst_35 : f32 to vector<1x32xf32>
    %88 = arith.mulf %87, %86 : vector<1x32xf32>
    %cst_36 = arith.constant 5.000000e-01 : f32
    %89 = vector.broadcast %cst_36 : f32 to vector<1x32xf32>
    %90 = arith.addf %88, %89 : vector<1x32xf32>
    %91 = vector.extract_strided_slice %80 {offsets = [0, 64], sizes = [1, 32], strides = [1, 1]} : vector<1x128xf32> to vector<1x32xf32>
    %92 = vector.extract_strided_slice %80 {offsets = [0, 96], sizes = [1, 32], strides = [1, 1]} : vector<1x128xf32> to vector<1x32xf32>
    %cst_37 = arith.constant 5.000000e-01 : f32
    %93 = vector.broadcast %cst_37 : f32 to vector<1x32xf32>
    %94 = arith.mulf %93, %92 : vector<1x32xf32>
    %cst_38 = arith.constant 5.000000e-01 : f32
    %95 = vector.broadcast %cst_38 : f32 to vector<1x32xf32>
    %96 = arith.addf %94, %95 : vector<1x32xf32>
    %97 = arith.mulf %90, %72 : vector<1x32xf32>
    %98 = arith.mulf %85, %91 : vector<1x32xf32>
    %99 = arith.addf %97, %98 : vector<1x32xf32>
    %100 = math.tanh %99 : vector<1x32xf32>
    %101 = arith.mulf %96, %100 : vector<1x32xf32>
    %c3_i32 = arith.constant 3 : i32
    %102 = arith.index_cast %c3_i32 : i32 to index
    %c0_39 = arith.constant 0 : index
    %103 = vector.load %arg6[%102, %c0_39] : memref<8x128xf32, #tpu.memory_space<vmem>>, vector<1x128xf32>
    %cst_40 = arith.constant dense<0.000000e+00> : vector<1x128xf32>
    %104 = tpu.matmul %101, %9, %cst_40 {dimension_numbers = #tpu.dot_dimension_numbers<[1], [1], [0], [0], [0, 0, 1, 0], [], []>} : vector<1x32xf32>, vector<128x32xf32>, vector<1x128xf32> -> vector<1x128xf32>
    %105 = arith.addf %103, %104 : vector<1x128xf32>
    %106 = arith.mulf %105, %18 : vector<1x128xf32>
    %107 = math.tanh %106 : vector<1x128xf32>
    %108 = vector.extract_strided_slice %107 {offsets = [0, 0], sizes = [1, 32], strides = [1, 1]} : vector<1x128xf32> to vector<1x32xf32>
    %cst_41 = arith.constant 5.000000e-01 : f32
    %109 = vector.broadcast %cst_41 : f32 to vector<1x32xf32>
    %110 = arith.mulf %109, %108 : vector<1x32xf32>
    %cst_42 = arith.constant 5.000000e-01 : f32
    %111 = vector.broadcast %cst_42 : f32 to vector<1x32xf32>
    %112 = arith.addf %110, %111 : vector<1x32xf32>
    %113 = vector.extract_strided_slice %107 {offsets = [0, 32], sizes = [1, 32], strides = [1, 1]} : vector<1x128xf32> to vector<1x32xf32>
    %cst_43 = arith.constant 5.000000e-01 : f32
    %114 = vector.broadcast %cst_43 : f32 to vector<1x32xf32>
    %115 = arith.mulf %114, %113 : vector<1x32xf32>
    %cst_44 = arith.constant 5.000000e-01 : f32
    %116 = vector.broadcast %cst_44 : f32 to vector<1x32xf32>
    %117 = arith.addf %115, %116 : vector<1x32xf32>
    %118 = vector.extract_strided_slice %107 {offsets = [0, 64], sizes = [1, 32], strides = [1, 1]} : vector<1x128xf32> to vector<1x32xf32>
    %119 = vector.extract_strided_slice %107 {offsets = [0, 96], sizes = [1, 32], strides = [1, 1]} : vector<1x128xf32> to vector<1x32xf32>
    %cst_45 = arith.constant 5.000000e-01 : f32
    %120 = vector.broadcast %cst_45 : f32 to vector<1x32xf32>
    %121 = arith.mulf %120, %119 : vector<1x32xf32>
    %cst_46 = arith.constant 5.000000e-01 : f32
    %122 = vector.broadcast %cst_46 : f32 to vector<1x32xf32>
    %123 = arith.addf %121, %122 : vector<1x32xf32>
    %124 = arith.mulf %117, %99 : vector<1x32xf32>
    %125 = arith.mulf %112, %118 : vector<1x32xf32>
    %126 = arith.addf %124, %125 : vector<1x32xf32>
    %127 = math.tanh %126 : vector<1x32xf32>
    %128 = arith.mulf %123, %127 : vector<1x32xf32>
    %c4_i32 = arith.constant 4 : i32
    %129 = arith.index_cast %c4_i32 : i32 to index
    %c0_47 = arith.constant 0 : index
    %130 = vector.load %arg6[%129, %c0_47] : memref<8x128xf32, #tpu.memory_space<vmem>>, vector<1x128xf32>
    %cst_48 = arith.constant dense<0.000000e+00> : vector<1x128xf32>
    %131 = tpu.matmul %128, %9, %cst_48 {dimension_numbers = #tpu.dot_dimension_numbers<[1], [1], [0], [0], [0, 0, 1, 0], [], []>} : vector<1x32xf32>, vector<128x32xf32>, vector<1x128xf32> -> vector<1x128xf32>
    %132 = arith.addf %130, %131 : vector<1x128xf32>
    %133 = arith.mulf %132, %18 : vector<1x128xf32>
    %134 = math.tanh %133 : vector<1x128xf32>
    %135 = vector.extract_strided_slice %134 {offsets = [0, 0], sizes = [1, 32], strides = [1, 1]} : vector<1x128xf32> to vector<1x32xf32>
    %cst_49 = arith.constant 5.000000e-01 : f32
    %136 = vector.broadcast %cst_49 : f32 to vector<1x32xf32>
    %137 = arith.mulf %136, %135 : vector<1x32xf32>
    %cst_50 = arith.constant 5.000000e-01 : f32
    %138 = vector.broadcast %cst_50 : f32 to vector<1x32xf32>
    %139 = arith.addf %137, %138 : vector<1x32xf32>
    %140 = vector.extract_strided_slice %134 {offsets = [0, 32], sizes = [1, 32], strides = [1, 1]} : vector<1x128xf32> to vector<1x32xf32>
    %cst_51 = arith.constant 5.000000e-01 : f32
    %141 = vector.broadcast %cst_51 : f32 to vector<1x32xf32>
    %142 = arith.mulf %141, %140 : vector<1x32xf32>
    %cst_52 = arith.constant 5.000000e-01 : f32
    %143 = vector.broadcast %cst_52 : f32 to vector<1x32xf32>
    %144 = arith.addf %142, %143 : vector<1x32xf32>
    %145 = vector.extract_strided_slice %134 {offsets = [0, 64], sizes = [1, 32], strides = [1, 1]} : vector<1x128xf32> to vector<1x32xf32>
    %146 = vector.extract_strided_slice %134 {offsets = [0, 96], sizes = [1, 32], strides = [1, 1]} : vector<1x128xf32> to vector<1x32xf32>
    %cst_53 = arith.constant 5.000000e-01 : f32
    %147 = vector.broadcast %cst_53 : f32 to vector<1x32xf32>
    %148 = arith.mulf %147, %146 : vector<1x32xf32>
    %cst_54 = arith.constant 5.000000e-01 : f32
    %149 = vector.broadcast %cst_54 : f32 to vector<1x32xf32>
    %150 = arith.addf %148, %149 : vector<1x32xf32>
    %151 = arith.mulf %144, %126 : vector<1x32xf32>
    %152 = arith.mulf %139, %145 : vector<1x32xf32>
    %153 = arith.addf %151, %152 : vector<1x32xf32>
    %154 = math.tanh %153 : vector<1x32xf32>
    %155 = arith.mulf %150, %154 : vector<1x32xf32>
    %c5_i32 = arith.constant 5 : i32
    %156 = arith.index_cast %c5_i32 : i32 to index
    %c0_55 = arith.constant 0 : index
    %157 = vector.load %arg6[%156, %c0_55] : memref<8x128xf32, #tpu.memory_space<vmem>>, vector<1x128xf32>
    %cst_56 = arith.constant dense<0.000000e+00> : vector<1x128xf32>
    %158 = tpu.matmul %155, %9, %cst_56 {dimension_numbers = #tpu.dot_dimension_numbers<[1], [1], [0], [0], [0, 0, 1, 0], [], []>} : vector<1x32xf32>, vector<128x32xf32>, vector<1x128xf32> -> vector<1x128xf32>
    %159 = arith.addf %157, %158 : vector<1x128xf32>
    %160 = arith.mulf %159, %18 : vector<1x128xf32>
    %161 = math.tanh %160 : vector<1x128xf32>
    %162 = vector.extract_strided_slice %161 {offsets = [0, 0], sizes = [1, 32], strides = [1, 1]} : vector<1x128xf32> to vector<1x32xf32>
    %cst_57 = arith.constant 5.000000e-01 : f32
    %163 = vector.broadcast %cst_57 : f32 to vector<1x32xf32>
    %164 = arith.mulf %163, %162 : vector<1x32xf32>
    %cst_58 = arith.constant 5.000000e-01 : f32
    %165 = vector.broadcast %cst_58 : f32 to vector<1x32xf32>
    %166 = arith.addf %164, %165 : vector<1x32xf32>
    %167 = vector.extract_strided_slice %161 {offsets = [0, 32], sizes = [1, 32], strides = [1, 1]} : vector<1x128xf32> to vector<1x32xf32>
    %cst_59 = arith.constant 5.000000e-01 : f32
    %168 = vector.broadcast %cst_59 : f32 to vector<1x32xf32>
    %169 = arith.mulf %168, %167 : vector<1x32xf32>
    %cst_60 = arith.constant 5.000000e-01 : f32
    %170 = vector.broadcast %cst_60 : f32 to vector<1x32xf32>
    %171 = arith.addf %169, %170 : vector<1x32xf32>
    %172 = vector.extract_strided_slice %161 {offsets = [0, 64], sizes = [1, 32], strides = [1, 1]} : vector<1x128xf32> to vector<1x32xf32>
    %173 = vector.extract_strided_slice %161 {offsets = [0, 96], sizes = [1, 32], strides = [1, 1]} : vector<1x128xf32> to vector<1x32xf32>
    %cst_61 = arith.constant 5.000000e-01 : f32
    %174 = vector.broadcast %cst_61 : f32 to vector<1x32xf32>
    %175 = arith.mulf %174, %173 : vector<1x32xf32>
    %cst_62 = arith.constant 5.000000e-01 : f32
    %176 = vector.broadcast %cst_62 : f32 to vector<1x32xf32>
    %177 = arith.addf %175, %176 : vector<1x32xf32>
    %178 = arith.mulf %171, %153 : vector<1x32xf32>
    %179 = arith.mulf %166, %172 : vector<1x32xf32>
    %180 = arith.addf %178, %179 : vector<1x32xf32>
    %181 = math.tanh %180 : vector<1x32xf32>
    %182 = arith.mulf %177, %181 : vector<1x32xf32>
    %c6_i32 = arith.constant 6 : i32
    %183 = arith.index_cast %c6_i32 : i32 to index
    %c0_63 = arith.constant 0 : index
    %184 = vector.load %arg6[%183, %c0_63] : memref<8x128xf32, #tpu.memory_space<vmem>>, vector<1x128xf32>
    %cst_64 = arith.constant dense<0.000000e+00> : vector<1x128xf32>
    %185 = tpu.matmul %182, %9, %cst_64 {dimension_numbers = #tpu.dot_dimension_numbers<[1], [1], [0], [0], [0, 0, 1, 0], [], []>} : vector<1x32xf32>, vector<128x32xf32>, vector<1x128xf32> -> vector<1x128xf32>
    %186 = arith.addf %184, %185 : vector<1x128xf32>
    %187 = arith.mulf %186, %18 : vector<1x128xf32>
    %188 = math.tanh %187 : vector<1x128xf32>
    %189 = vector.extract_strided_slice %188 {offsets = [0, 0], sizes = [1, 32], strides = [1, 1]} : vector<1x128xf32> to vector<1x32xf32>
    %cst_65 = arith.constant 5.000000e-01 : f32
    %190 = vector.broadcast %cst_65 : f32 to vector<1x32xf32>
    %191 = arith.mulf %190, %189 : vector<1x32xf32>
    %cst_66 = arith.constant 5.000000e-01 : f32
    %192 = vector.broadcast %cst_66 : f32 to vector<1x32xf32>
    %193 = arith.addf %191, %192 : vector<1x32xf32>
    %194 = vector.extract_strided_slice %188 {offsets = [0, 32], sizes = [1, 32], strides = [1, 1]} : vector<1x128xf32> to vector<1x32xf32>
    %cst_67 = arith.constant 5.000000e-01 : f32
    %195 = vector.broadcast %cst_67 : f32 to vector<1x32xf32>
    %196 = arith.mulf %195, %194 : vector<1x32xf32>
    %cst_68 = arith.constant 5.000000e-01 : f32
    %197 = vector.broadcast %cst_68 : f32 to vector<1x32xf32>
    %198 = arith.addf %196, %197 : vector<1x32xf32>
    %199 = vector.extract_strided_slice %188 {offsets = [0, 64], sizes = [1, 32], strides = [1, 1]} : vector<1x128xf32> to vector<1x32xf32>
    %200 = vector.extract_strided_slice %188 {offsets = [0, 96], sizes = [1, 32], strides = [1, 1]} : vector<1x128xf32> to vector<1x32xf32>
    %cst_69 = arith.constant 5.000000e-01 : f32
    %201 = vector.broadcast %cst_69 : f32 to vector<1x32xf32>
    %202 = arith.mulf %201, %200 : vector<1x32xf32>
    %cst_70 = arith.constant 5.000000e-01 : f32
    %203 = vector.broadcast %cst_70 : f32 to vector<1x32xf32>
    %204 = arith.addf %202, %203 : vector<1x32xf32>
    %205 = arith.mulf %198, %180 : vector<1x32xf32>
    %206 = arith.mulf %193, %199 : vector<1x32xf32>
    %207 = arith.addf %205, %206 : vector<1x32xf32>
    %208 = math.tanh %207 : vector<1x32xf32>
    %209 = arith.mulf %204, %208 : vector<1x32xf32>
    %c7_i32 = arith.constant 7 : i32
    %210 = arith.index_cast %c7_i32 : i32 to index
    %c0_71 = arith.constant 0 : index
    %211 = vector.load %arg6[%210, %c0_71] : memref<8x128xf32, #tpu.memory_space<vmem>>, vector<1x128xf32>
    %cst_72 = arith.constant dense<0.000000e+00> : vector<1x128xf32>
    %212 = tpu.matmul %209, %9, %cst_72 {dimension_numbers = #tpu.dot_dimension_numbers<[1], [1], [0], [0], [0, 0, 1, 0], [], []>} : vector<1x32xf32>, vector<128x32xf32>, vector<1x128xf32> -> vector<1x128xf32>
    %213 = arith.addf %211, %212 : vector<1x128xf32>
    %214 = arith.mulf %213, %18 : vector<1x128xf32>
    %215 = math.tanh %214 : vector<1x128xf32>
    %216 = vector.extract_strided_slice %215 {offsets = [0, 0], sizes = [1, 32], strides = [1, 1]} : vector<1x128xf32> to vector<1x32xf32>
    %cst_73 = arith.constant 5.000000e-01 : f32
    %217 = vector.broadcast %cst_73 : f32 to vector<1x32xf32>
    %218 = arith.mulf %217, %216 : vector<1x32xf32>
    %cst_74 = arith.constant 5.000000e-01 : f32
    %219 = vector.broadcast %cst_74 : f32 to vector<1x32xf32>
    %220 = arith.addf %218, %219 : vector<1x32xf32>
    %221 = vector.extract_strided_slice %215 {offsets = [0, 32], sizes = [1, 32], strides = [1, 1]} : vector<1x128xf32> to vector<1x32xf32>
    %cst_75 = arith.constant 5.000000e-01 : f32
    %222 = vector.broadcast %cst_75 : f32 to vector<1x32xf32>
    %223 = arith.mulf %222, %221 : vector<1x32xf32>
    %cst_76 = arith.constant 5.000000e-01 : f32
    %224 = vector.broadcast %cst_76 : f32 to vector<1x32xf32>
    %225 = arith.addf %223, %224 : vector<1x32xf32>
    %226 = vector.extract_strided_slice %215 {offsets = [0, 64], sizes = [1, 32], strides = [1, 1]} : vector<1x128xf32> to vector<1x32xf32>
    %227 = vector.extract_strided_slice %215 {offsets = [0, 96], sizes = [1, 32], strides = [1, 1]} : vector<1x128xf32> to vector<1x32xf32>
    %cst_77 = arith.constant 5.000000e-01 : f32
    %228 = vector.broadcast %cst_77 : f32 to vector<1x32xf32>
    %229 = arith.mulf %228, %227 : vector<1x32xf32>
    %cst_78 = arith.constant 5.000000e-01 : f32
    %230 = vector.broadcast %cst_78 : f32 to vector<1x32xf32>
    %231 = arith.addf %229, %230 : vector<1x32xf32>
    %232 = arith.mulf %225, %207 : vector<1x32xf32>
    %233 = arith.mulf %220, %226 : vector<1x32xf32>
    %234 = arith.addf %232, %233 : vector<1x32xf32>
    %235 = math.tanh %234 : vector<1x32xf32>
    %236 = arith.mulf %231, %235 : vector<1x32xf32>
    %c8_i32 = arith.constant 8 : i32
    %c0_79 = arith.constant 0 : index
    %c0_80 = arith.constant 0 : index
    %237 = vector.load %arg5[%c0_79, %c0_80] : memref<1x32xf32, #tpu.memory_space<vmem>>, vector<1x32xf32>
    tpu.vector_store %arg5[%c0_79, %c0_80], %236 {strides = array<i32>} : memref<1x32xf32, #tpu.memory_space<vmem>>, vector<1x32xf32>,
    return
  }
}

</mosaic_0001>

<llo_original>
// kernel: tpu_custom_call.1
$region0: #{tpu_custom_call.1}
  #allocation0 [shape = 'u32[]', space=smem, size = 0x4, offset = 0x4, fixed_abs, tag = 'smem constant byte address 0x4 - core index']
  #allocation1 [shape = 'u32[144,128]{1,0:T(1,128)}', space=vmem, size = 0x12000, scoped, tag = 'internal scratch']
  #allocation2 [shape = 'f32[8,128]{1,0:T(8,128)}', space=vmem, size = 0x1000, scoped, tag = 'scratch operand']
  %s0 = inlined_call_operand.vmem [shape: f32[8,16], index: 0, kind: input, shape index: {}]
  %s1 = inlined_call_operand.vmem [shape: f32[128,16], index: 1, kind: input, shape index: {}]
  %s2 = inlined_call_operand.vmem [shape: f32[128,32], index: 2, kind: input, shape index: {}]
  %s3 = inlined_call_operand.vmem [shape: f32[1,128], index: 3, kind: input, shape index: {}]
  %s4 = inlined_call_operand.vmem [shape: f32[1,128], index: 4, kind: input, shape index: {}]
  %s5 = inlined_call_operand.hbm [shape: f32[1,32], index: 5, kind: output, shape index: {}]
  %s6 = sld [smem:[#allocation0]]
  $region30: #{tpu_custom_call.1} parent=0
    _
  %s8 = ssub.s32 1, %s6
  %s9 = scalar_select 0, %s8, %s6
  $region1: #{tpu_custom_call.1} parent=0
    #allocation3 [shape = 'u8[512]{0}', space=vmem, size = 0x400, scoped, tag = 'output window, operand 0, single buffered']
    #allocation4 [shape = 's32[1]{0}', space=sflag, size = 0x4, scoped, tag = 'scoped memory for tpu_custom_call.1']
    %10 = vsyncpa [#allocation4], 0
    // Predicated region
    $region2: #{tpu_custom_call.1} parent=1 // pred_check
      _
    $region3: #{tpu_custom_call.1} parent=1 // pred_check_branch
      %12 = sbr.rel (0) target = $region5
    $region4: #{tpu_custom_call.1} parent=1 // pred_region
      _
    $region5: #{tpu_custom_call.1} parent=1 // pred_fallthru
      _
    // Predicated region
    $region6: #{tpu_custom_call.1} parent=1 // pred_check
      _
    $region7: #{tpu_custom_call.1} parent=1 // pred_check_branch
      %14 = sbr.rel (0) target = $region9
    $region8: #{tpu_custom_call.1} parent=1 // pred_region
      _
    $region9: #{tpu_custom_call.1} parent=1 // pred_fallthru
      _
    // Predicated region
    $region10: #{tpu_custom_call.1} parent=1 // pred_check
      _
    $region11: #{tpu_custom_call.1} parent=1 // pred_check_branch
      %16 = sbr.rel (0) target = $region13
    $region12: #{tpu_custom_call.1} parent=1 // pred_region
      _
    $region13: #{tpu_custom_call.1} parent=1 // pred_fallthru
      _
    // Predicated region
    $region14: #{tpu_custom_call.1} parent=1 // pred_check
      _
    $region15: #{tpu_custom_call.1} parent=1 // pred_check_branch
      %18 = sbr.rel (0) target = $region17
    $region16: #{tpu_custom_call.1} parent=1 // pred_region
      _
    $region17: #{tpu_custom_call.1} parent=1 // pred_fallthru
      _
    // Predicated region
    $region18: #{tpu_custom_call.1} parent=1 // pred_check
      _
    $region19: #{tpu_custom_call.1} parent=1 // pred_check_branch
      %20 = sbr.rel (0) target = $region21
    $region20: #{tpu_custom_call.1} parent=1 // pred_region
      _
    $region21: #{tpu_custom_call.1} parent=1 // pred_fallthru
      _
    %v21 = vld [vmem:[%s3] sm:$0x1]
    %v22 = vld [vmem:[%s4] sm:$0x1]
    %v23 = vadd.f32 %v21, %v22
    %v24 = vld [vmem:[%s0] sm:$0xff]
    %v25 = vld [vmem:[%s1] sm:$0xff]
    %v26 = vld [vmem:[%s1 + $0x8] sm:$0xff]
    %v27 = vld [vmem:[%s1 + $0x10] sm:$0xff]
    %v28 = vld [vmem:[%s1 + $0x18] sm:$0xff]
    %v29 = vld [vmem:[%s1 + $0x20] sm:$0xff]
    %v30 = vld [vmem:[%s1 + $0x28] sm:$0xff]
    %v31 = vld [vmem:[%s1 + $0x30] sm:$0xff]
    %v32 = vld [vmem:[%s1 + $0x38] sm:$0xff]
    %v33 = vld [vmem:[%s1 + $0x40] sm:$0xff]
    %v34 = vld [vmem:[%s1 + $0x48] sm:$0xff]
    %v35 = vld [vmem:[%s1 + $0x50] sm:$0xff]
    %v36 = vld [vmem:[%s1 + $0x58] sm:$0xff]
    %v37 = vld [vmem:[%s1 + $0x60] sm:$0xff]
    %v38 = vld [vmem:[%s1 + $0x68] sm:$0xff]
    %v39 = vld [vmem:[%s1 + $0x70] sm:$0xff]
    %v40 = vld [vmem:[%s1 + $0x78] sm:$0xff]
    %v42 = vlaneseq
    %v43 = vshrl.u32 %v42, 7
    %v44 = vsub.s32 0, %v43
    %v45 = vrot.slane %v23, %v44
    %vm47 = vcmask 130048
    %v49 = vsel %vm47, %v24, 0
    %v52 = vsel %vm47, %v25, 0
    %v55 = vsel %vm47, %v26, 0
    %v58 = vsel %vm47, %v27, 0
    %v61 = vsel %vm47, %v28, 0
    %v64 = vsel %vm47, %v29, 0
    %v67 = vsel %vm47, %v30, 0
    %v70 = vsel %vm47, %v31, 0
    %v73 = vsel %vm47, %v32, 0
    %v76 = vsel %vm47, %v33, 0
    %v79 = vsel %vm47, %v34, 0
    %v82 = vsel %vm47, %v35, 0
    %v85 = vsel %vm47, %v36, 0
    %v88 = vsel %vm47, %v37, 0
    %v91 = vsel %vm47, %v38, 0
    %v94 = vsel %vm47, %v39, 0
    %v97 = vsel %vm47, %v40, 0
    %99 = vmatprep.subr.mxu0 0.0
    %100 = vmatpush1.xpose.msra.mxu0 %v52
    %101 = vmatprep.subr.mxu0 0.0
    %102 = vmatpush1.xpose.msra.mxu0 %v55
    %103 = vmatprep.subr.mxu0 0.0
    %104 = vmatpush1.xpose.msra.mxu0 %v58
    %105 = vmatprep.subr.mxu0 0.0
    %106 = vmatpush1.xpose.msra.mxu0 %v61
    %107 = vmatprep.subr.mxu0 0.0
    %108 = vmatpush1.xpose.msra.mxu0 %v64
    %109 = vmatprep.subr.mxu0 0.0
    %110 = vmatpush1.xpose.msra.mxu0 %v67
    %111 = vmatprep.subr.mxu0 0.0
    %112 = vmatpush1.xpose.msra.mxu0 %v70
    %113 = vmatprep.subr.mxu0 0.0
    %114 = vmatpush1.xpose.msra.mxu0 %v73
    %115 = vmatprep.subr.mxu0 0.0
    %116 = vmatpush1.xpose.msra.mxu0 %v76
    %117 = vmatprep.subr.mxu0 0.0
    %118 = vmatpush1.xpose.msra.mxu0 %v79
    %119 = vmatprep.subr.mxu0 0.0
    %120 = vmatpush1.xpose.msra.mxu0 %v82
    %121 = vmatprep.subr.mxu0 0.0
    %122 = vmatpush1.xpose.msra.mxu0 %v85
    %123 = vmatprep.subr.mxu0 0.0
    %124 = vmatpush1.xpose.msra.mxu0 %v88
    %125 = vmatprep.subr.mxu0 0.0
    %126 = vmatpush1.xpose.msra.mxu0 %v91
    %127 = vmatprep.subr.mxu0 0.0
    %128 = vmatpush1.xpose.msra.mxu0 %v94
    %129 = vmatprep.subr.mxu0 0.0
    %130 = vmatpush1.xpose.msra.mxu0 %v97
    %131 = vmatprep.subr.mxu0 0.0
    %132 = vmatpush1.xpose.msra.mxu0 0.0
    %133 = vmatprep.subr.mxu0 0.0
    %134 = vmatpush1.xpose.msra.mxu0 0.0
    %135 = vmatprep.subr.mxu0 0.0
    %136 = vmatpush1.xpose.msra.mxu0 0.0
    %137 = vmatprep.subr.mxu0 0.0
    %138 = vmatpush1.xpose.msra.mxu0 0.0
    %139 = vmatprep.subr.mxu0 0.0
    %140 = vmatpush1.xpose.msra.mxu0 0.0
    %141 = vmatprep.subr.mxu0 0.0
    %142 = vmatpush1.xpose.msra.mxu0 0.0
    %143 = vmatprep.subr.mxu0 0.0
    %144 = vmatpush1.xpose.msra.mxu0 0.0
    %145 = vmatprep.subr.mxu0 0.0
    %146 = vmatpush1.xpose.msra.mxu0 0.0
    %147 = vmatprep.subr.mxu0 0.0
    %148 = vmatpush1.xpose.msra.mxu0 0.0
    %149 = vmatprep.subr.mxu0 0.0
    %150 = vmatpush1.xpose.msra.mxu0 0.0
    %151 = vmatprep.subr.mxu0 0.0
    %152 = vmatpush1.xpose.msra.mxu0 0.0
    %153 = vmatprep.subr.mxu0 0.0
    %154 = vmatpush1.xpose.msra.mxu0 0.0
    %155 = vmatprep.subr.mxu0 0.0
    %156 = vmatpush1.xpose.msra.mxu0 0.0
    %157 = vmatprep.subr.mxu0 0.0
    %158 = vmatpush1.xpose.msra.mxu0 0.0
    %159 = vmatprep.subr.mxu0 0.0
    %160 = vmatpush1.xpose.msra.mxu0 0.0
    %161 = vmatprep.subr.mxu0 0.0
    %162 = vmatpush1.xpose.msra.mxu0 0.0
    %163 = vmatprep.mubr.f32.mxu0 0.0
    %164 = vmatmul.mubr.f32.gmra.mrb[0].mxu0 %v49
    %v165 = vpop.f32.mrb[0].mxu0
    %v166 = vadd.f32 %v45, %v165
    %v167 = vpop.f32.mrb[0].mxu0
    %168 = vdwg.mxu0
    %169 = vst [vmem:[#allocation2] sm:$0xff] %v166
    %v170 = vld [vmem:[%s2] sm:$0xff]
    %v171 = vld [vmem:[%s2 + $0x8] sm:$0xff]
    %v172 = vld [vmem:[%s2 + $0x10] sm:$0xff]
    %v173 = vld [vmem:[%s2 + $0x18] sm:$0xff]
    %v174 = vld [vmem:[%s2 + $0x20] sm:$0xff]
    %v175 = vld [vmem:[%s2 + $0x28] sm:$0xff]
    %v176 = vld [vmem:[%s2 + $0x30] sm:$0xff]
    %v177 = vld [vmem:[%s2 + $0x38] sm:$0xff]
    %v178 = vld [vmem:[%s2 + $0x40] sm:$0xff]
    %v179 = vld [vmem:[%s2 + $0x48] sm:$0xff]
    %v180 = vld [vmem:[%s2 + $0x50] sm:$0xff]
    %v181 = vld [vmem:[%s2 + $0x58] sm:$0xff]
    %v182 = vld [vmem:[%s2 + $0x60] sm:$0xff]
    %v183 = vld [vmem:[%s2 + $0x68] sm:$0xff]
    %v184 = vld [vmem:[%s2 + $0x70] sm:$0xff]
    %v185 = vld [vmem:[%s2 + $0x78] sm:$0xff]
    %v186 = vlaneseq
    %v187 = vand.u32 %v186, 127
    %vm188 = vcmp.ge.s32.totalorder %v187, 64
    %vm189 = vcmp.lt.s32.totalorder %v187, 96
    %vm190 = vmand %vm188, %vm189
    %v191 = vsel %vm190, 1.0, 0.5
    %v192 = vld [vmem:[#allocation2] sm:$0x1]
    %vm193 = vcmask 261120
    %v195 = vsel %vm193, 0.0, 0
    %v198 = vsel %vm193, %v170, 0
    %v201 = vsel %vm193, %v171, 0
    %v204 = vsel %vm193, %v172, 0
    %v207 = vsel %vm193, %v173, 0
    %v210 = vsel %vm193, %v174, 0
    %v213 = vsel %vm193, %v175, 0
    %v216 = vsel %vm193, %v176, 0
    %v219 = vsel %vm193, %v177, 0
    %v222 = vsel %vm193, %v178, 0
    %v225 = vsel %vm193, %v179, 0
    %v228 = vsel %vm193, %v180, 0
    %v231 = vsel %vm193, %v181, 0
    %v234 = vsel %vm193, %v182, 0
    %v237 = vsel %vm193, %v183, 0
    %v240 = vsel %vm193, %v184, 0
    %v243 = vsel %vm193, %v185, 0
    %245 = vmatprep.subr.mxu0 0.0
    %246 = vmatpush1.xpose.msra.mxu0 %v198
    %247 = vmatprep.subr.mxu0 0.0
    %248 = vmatpush1.xpose.msra.mxu0 %v201
    %249 = vmatprep.subr.mxu0 0.0
    %250 = vmatpush1.xpose.msra.mxu0 %v204
    %251 = vmatprep.subr.mxu0 0.0
    %252 = vmatpush1.xpose.msra.mxu0 %v207
    %253 = vmatprep.subr.mxu0 0.0
    %254 = vmatpush1.xpose.msra.mxu0 %v210
    %255 = vmatprep.subr.mxu0 0.0
    %256 = vmatpush1.xpose.msra.mxu0 %v213
    %257 = vmatprep.subr.mxu0 0.0
    %258 = vmatpush1.xpose.msra.mxu0 %v216
    %259 = vmatprep.subr.mxu0 0.0
    %260 = vmatpush1.xpose.msra.mxu0 %v219
    %261 = vmatprep.subr.mxu0 0.0
    %262 = vmatpush1.xpose.msra.mxu0 %v222
    %263 = vmatprep.subr.mxu0 0.0
    %264 = vmatpush1.xpose.msra.mxu0 %v225
    %265 = vmatprep.subr.mxu0 0.0
    %266 = vmatpush1.xpose.msra.mxu0 %v228
    %267 = vmatprep.subr.mxu0 0.0
    %268 = vmatpush1.xpose.msra.mxu0 %v231
    %269 = vmatprep.subr.mxu0 0.0
    %270 = vmatpush1.xpose.msra.mxu0 %v234
    %271 = vmatprep.subr.mxu0 0.0
    %272 = vmatpush1.xpose.msra.mxu0 %v237
    %273 = vmatprep.subr.mxu0 0.0
    %274 = vmatpush1.xpose.msra.mxu0 %v240
    %275 = vmatprep.subr.mxu0 0.0
    %276 = vmatpush1.xpose.msra.mxu0 %v243
    %277 = vmatprep.subr.mxu0 0.0
    %278 = vmatpush1.xpose.msra.mxu0 0.0
    %279 = vmatprep.subr.mxu0 0.0
    %280 = vmatpush1.xpose.msra.mxu0 0.0
    %281 = vmatprep.subr.mxu0 0.0
    %282 = vmatpush1.xpose.msra.mxu0 0.0
    %283 = vmatprep.subr.mxu0 0.0
    %284 = vmatpush1.xpose.msra.mxu0 0.0
    %285 = vmatprep.subr.mxu0 0.0
    %286 = vmatpush1.xpose.msra.mxu0 0.0
    %287 = vmatprep.subr.mxu0 0.0
    %288 = vmatpush1.xpose.msra.mxu0 0.0
    %289 = vmatprep.subr.mxu0 0.0
    %290 = vmatpush1.xpose.msra.mxu0 0.0
    %291 = vmatprep.subr.mxu0 0.0
    %292 = vmatpush1.xpose.msra.mxu0 0.0
    %293 = vmatprep.subr.mxu0 0.0
    %294 = vmatpush1.xpose.msra.mxu0 0.0
    %295 = vmatprep.subr.mxu0 0.0
    %296 = vmatpush1.xpose.msra.mxu0 0.0
    %297 = vmatprep.subr.mxu0 0.0
    %298 = vmatpush1.xpose.msra.mxu0 0.0
    %299 = vmatprep.subr.mxu0 0.0
    %300 = vmatpush1.xpose.msra.mxu0 0.0
    %301 = vmatprep.subr.mxu0 0.0
    %302 = vmatpush1.xpose.msra.mxu0 0.0
    %303 = vmatprep.subr.mxu0 0.0
    %304 = vmatpush1.xpose.msra.mxu0 0.0
    %305 = vmatprep.subr.mxu0 0.0
    %306 = vmatpush1.xpose.msra.mxu0 0.0
    %307 = vmatprep.subr.mxu0 0.0
    %308 = vmatpush1.xpose.msra.mxu0 0.0
    %309 = vmatprep.mubr.f32.mxu0 0.0
    %310 = vmatmul.mubr.f32.gmra.mrb[0].mxu0 %v195
    %v311 = vpop.f32.mrb[0].mxu0
    %v312 = vadd.f32 0.0, %v311
    %v313 = vpop.f32.mrb[0].mxu0
    %314 = vdwg.mxu0
    %v315 = vadd.f32 %v192, %v312
    %v316 = vmul.f32 %v315, %v191
    %v317 = vtanh.pop %v316
    %v318 = vmul.f32 %v317, 0.5
    %v319 = vadd.f32 %v318, 0.5
    %v320 = vmul.f32 %v319, 0.0
    %322 = vrot.lane.b32.xlu0 %v317, 64
    %v323 = vpop.permute.xlu0 %322
    %v325 = vmul.f32 %v319, %v323
    %327 = vrot.lane.b32.xlu0 %v325, 32
    %v328 = vpop.permute.xlu0 %327
    %v330 = vadd.f32 %v320, %v328
    %v331 = vtanh.pop %v330
    %333 = vrot.lane.b32.xlu0 %v331, 64
    %v334 = vpop.permute.xlu0 %333
    %v336 = vmul.f32 %v319, %v334
    %v337 = vld [vmem:[#allocation2 + $0x1] sm:$0x1]
    %339 = vrot.lane.b32.xlu0 %v336, 32
    %v340 = vpop.permute.xlu0 %339
    %v341 = vsel %vm193, %v340, 0
    %343 = vmatprep.subr.mxu0 0.0
    %344 = vmatpush1.xpose.msra.mxu0 %v198
    %345 = vmatprep.subr.mxu0 0.0
    %346 = vmatpush1.xpose.msra.mxu0 %v201
    %347 = vmatprep.subr.mxu0 0.0
    %348 = vmatpush1.xpose.msra.mxu0 %v204
    %349 = vmatprep.subr.mxu0 0.0
    %350 = vmatpush1.xpose.msra.mxu0 %v207
    %351 = vmatprep.subr.mxu0 0.0
    %352 = vmatpush1.xpose.msra.mxu0 %v210
    %353 = vmatprep.subr.mxu0 0.0
    %354 = vmatpush1.xpose.msra.mxu0 %v213
    %355 = vmatprep.subr.mxu0 0.0
    %356 = vmatpush1.xpose.msra.mxu0 %v216
    %357 = vmatprep.subr.mxu0 0.0
    %358 = vmatpush1.xpose.msra.mxu0 %v219
    %359 = vmatprep.subr.mxu0 0.0
    %360 = vmatpush1.xpose.msra.mxu0 %v222
    %361 = vmatprep.subr.mxu0 0.0
    %362 = vmatpush1.xpose.msra.mxu0 %v225
    %363 = vmatprep.subr.mxu0 0.0
    %364 = vmatpush1.xpose.msra.mxu0 %v228
    %365 = vmatprep.subr.mxu0 0.0
    %366 = vmatpush1.xpose.msra.mxu0 %v231
    %367 = vmatprep.subr.mxu0 0.0
    %368 = vmatpush1.xpose.msra.mxu0 %v234
    %369 = vmatprep.subr.mxu0 0.0
    %370 = vmatpush1.xpose.msra.mxu0 %v237
    %371 = vmatprep.subr.mxu0 0.0
    %372 = vmatpush1.xpose.msra.mxu0 %v240
    %373 = vmatprep.subr.mxu0 0.0
    %374 = vmatpush1.xpose.msra.mxu0 %v243
    %375 = vmatprep.subr.mxu0 0.0
    %376 = vmatpush1.xpose.msra.mxu0 0.0
    %377 = vmatprep.subr.mxu0 0.0
    %378 = vmatpush1.xpose.msra.mxu0 0.0
    %379 = vmatprep.subr.mxu0 0.0
    %380 = vmatpush1.xpose.msra.mxu0 0.0
    %381 = vmatprep.subr.mxu0 0.0
    %382 = vmatpush1.xpose.msra.mxu0 0.0
    %383 = vmatprep.subr.mxu0 0.0
    %384 = vmatpush1.xpose.msra.mxu0 0.0
    %385 = vmatprep.subr.mxu0 0.0
    %386 = vmatpush1.xpose.msra.mxu0 0.0
    %387 = vmatprep.subr.mxu0 0.0
    %388 = vmatpush1.xpose.msra.mxu0 0.0
    %389 = vmatprep.subr.mxu0 0.0
    %390 = vmatpush1.xpose.msra.mxu0 0.0
    %391 = vmatprep.subr.mxu0 0.0
    %392 = vmatpush1.xpose.msra.mxu0 0.0
    %393 = vmatprep.subr.mxu0 0.0
    %394 = vmatpush1.xpose.msra.mxu0 0.0
    %395 = vmatprep.subr.mxu0 0.0
    %396 = vmatpush1.xpose.msra.mxu0 0.0
    %397 = vmatprep.subr.mxu0 0.0
    %398 = vmatpush1.xpose.msra.mxu0 0.0
    %399 = vmatprep.subr.mxu0 0.0
    %400 = vmatpush1.xpose.msra.mxu0 0.0
    %401 = vmatprep.subr.mxu0 0.0
    %402 = vmatpush1.xpose.msra.mxu0 0.0
    %403 = vmatprep.subr.mxu0 0.0
    %404 = vmatpush1.xpose.msra.mxu0 0.0
    %405 = vmatprep.subr.mxu0 0.0
    %406 = vmatpush1.xpose.msra.mxu0 0.0
    %407 = vmatprep.mubr.f32.mxu0 0.0
    %408 = vmatmul.mubr.f32.gmra.mrb[0].mxu0 %v341
    %v409 = vpop.f32.mrb[0].mxu0
    %v410 = vadd.f32 0.0, %v409
    %v411 = vpop.f32.mrb[0].mxu0
    %412 = vdwg.mxu0
    %v413 = vadd.f32 %v337, %v410
    %v414 = vmul.f32 %v413, %v191
    %v415 = vtanh.pop %v414
    %v416 = vmul.f32 %v415, 0.5
    %v417 = vadd.f32 %v416, 0.5
    %v418 = vmul.f32 %v417, %v330
    %420 = vrot.lane.b32.xlu0 %v415, 64
    %v421 = vpop.permute.xlu0 %420
    %v423 = vmul.f32 %v417, %v421
    %425 = vrot.lane.b32.xlu0 %v423, 32
    %v426 = vpop.permute.xlu0 %425
    %v428 = vadd.f32 %v418, %v426
    %v429 = vtanh.pop %v428
    %431 = vrot.lane.b32.xlu0 %v429, 64
    %v432 = vpop.permute.xlu0 %431
    %v434 = vmul.f32 %v417, %v432
    %v435 = vld [vmem:[#allocation2 + $0x2] sm:$0x1]
    %437 = vrot.lane.b32.xlu0 %v434, 32
    %v438 = vpop.permute.xlu0 %437
    %v439 = vsel %vm193, %v438, 0
    %441 = vmatprep.subr.mxu0 0.0
    %442 = vmatpush1.xpose.msra.mxu0 %v198
    %443 = vmatprep.subr.mxu0 0.0
    %444 = vmatpush1.xpose.msra.mxu0 %v201
    %445 = vmatprep.subr.mxu0 0.0
    %446 = vmatpush1.xpose.msra.mxu0 %v204
    %447 = vmatprep.subr.mxu0 0.0
    %448 = vmatpush1.xpose.msra.mxu0 %v207
    %449 = vmatprep.subr.mxu0 0.0
    %450 = vmatpush1.xpose.msra.mxu0 %v210
    %451 = vmatprep.subr.mxu0 0.0
    %452 = vmatpush1.xpose.msra.mxu0 %v213
    %453 = vmatprep.subr.mxu0 0.0
    %454 = vmatpush1.xpose.msra.mxu0 %v216
    %455 = vmatprep.subr.mxu0 0.0
    %456 = vmatpush1.xpose.msra.mxu0 %v219
    %457 = vmatprep.subr.mxu0 0.0
    %458 = vmatpush1.xpose.msra.mxu0 %v222
    %459 = vmatprep.subr.mxu0 0.0
    %460 = vmatpush1.xpose.msra.mxu0 %v225
    %461 = vmatprep.subr.mxu0 0.0
    %462 = vmatpush1.xpose.msra.mxu0 %v228
    %463 = vmatprep.subr.mxu0 0.0
    %464 = vmatpush1.xpose.msra.mxu0 %v231
    %465 = vmatprep.subr.mxu0 0.0
    %466 = vmatpush1.xpose.msra.mxu0 %v234
    %467 = vmatprep.subr.mxu0 0.0
    %468 = vmatpush1.xpose.msra.mxu0 %v237
    %469 = vmatprep.subr.mxu0 0.0
    %470 = vmatpush1.xpose.msra.mxu0 %v240
    %471 = vmatprep.subr.mxu0 0.0
    %472 = vmatpush1.xpose.msra.mxu0 %v243
    %473 = vmatprep.subr.mxu0 0.0
    %474 = vmatpush1.xpose.msra.mxu0 0.0
    %475 = vmatprep.subr.mxu0 0.0
    %476 = vmatpush1.xpose.msra.mxu0 0.0
    %477 = vmatprep.subr.mxu0 0.0
    %478 = vmatpush1.xpose.msra.mxu0 0.0
    %479 = vmatprep.subr.mxu0 0.0
    %480 = vmatpush1.xpose.msra.mxu0 0.0
    %481 = vmatprep.subr.mxu0 0.0
    %482 = vmatpush1.xpose.msra.mxu0 0.0
    %483 = vmatprep.subr.mxu0 0.0
    %484 = vmatpush1.xpose.msra.mxu0 0.0
    %485 = vmatprep.subr.mxu0 0.0
    %486 = vmatpush1.xpose.msra.mxu0 0.0
    %487 = vmatprep.subr.mxu0 0.0
    %488 = vmatpush1.xpose.msra.mxu0 0.0
    %489 = vmatprep.subr.mxu0 0.0
    %490 = vmatpush1.xpose.msra.mxu0 0.0
    %491 = vmatprep.subr.mxu0 0.0
    %492 = vmatpush1.xpose.msra.mxu0 0.0
    %493 = vmatprep.subr.mxu0 0.0
    %494 = vmatpush1.xpose.msra.mxu0 0.0
    %495 = vmatprep.subr.mxu0 0.0
    %496 = vmatpush1.xpose.msra.mxu0 0.0
    %497 = vmatprep.subr.mxu0 0.0
    %498 = vmatpush1.xpose.msra.mxu0 0.0
    %499 = vmatprep.subr.mxu0 0.0
    %500 = vmatpush1.xpose.msra.mxu0 0.0
    %501 = vmatprep.subr.mxu0 0.0
    %502 = vmatpush1.xpose.msra.mxu0 0.0
    %503 = vmatprep.subr.mxu0 0.0
    %504 = vmatpush1.xpose.msra.mxu0 0.0
    %505 = vmatprep.mubr.f32.mxu0 0.0
    %506 = vmatmul.mubr.f32.gmra.mrb[0].mxu0 %v439
    %v507 = vpop.f32.mrb[0].mxu0
    %v508 = vadd.f32 0.0, %v507
    %v509 = vpop.f32.mrb[0].mxu0
    %510 = vdwg.mxu0
    %v511 = vadd.f32 %v435, %v508
    %v512 = vmul.f32 %v511, %v191
    %v513 = vtanh.pop %v512
    %v514 = vmul.f32 %v513, 0.5
    %v515 = vadd.f32 %v514, 0.5
    %v516 = vmul.f32 %v515, %v428
    %518 = vrot.lane.b32.xlu0 %v513, 64
    %v519 = vpop.permute.xlu0 %518
    %v521 = vmul.f32 %v515, %v519
    %523 = vrot.lane.b32.xlu0 %v521, 32
    %v524 = vpop.permute.xlu0 %523
    %v526 = vadd.f32 %v516, %v524
    %v527 = vtanh.pop %v526
    %529 = vrot.lane.b32.xlu0 %v527, 64
    %v530 = vpop.permute.xlu0 %529
    %v532 = vmul.f32 %v515, %v530
    %v533 = vld [vmem:[#allocation2 + $0x3] sm:$0x1]
    %535 = vrot.lane.b32.xlu0 %v532, 32
    %v536 = vpop.permute.xlu0 %535
    %v537 = vsel %vm193, %v536, 0
    %539 = vmatprep.subr.mxu0 0.0
    %540 = vmatpush1.xpose.msra.mxu0 %v198
    %541 = vmatprep.subr.mxu0 0.0
    %542 = vmatpush1.xpose.msra.mxu0 %v201
    %543 = vmatprep.subr.mxu0 0.0
    %544 = vmatpush1.xpose.msra.mxu0 %v204
    %545 = vmatprep.subr.mxu0 0.0
    %546 = vmatpush1.xpose.msra.mxu0 %v207
    %547 = vmatprep.subr.mxu0 0.0
    %548 = vmatpush1.xpose.msra.mxu0 %v210
    %549 = vmatprep.subr.mxu0 0.0
    %550 = vmatpush1.xpose.msra.mxu0 %v213
    %551 = vmatprep.subr.mxu0 0.0
    %552 = vmatpush1.xpose.msra.mxu0 %v216
    %553 = vmatprep.subr.mxu0 0.0
    %554 = vmatpush1.xpose.msra.mxu0 %v219
    %555 = vmatprep.subr.mxu0 0.0
    %556 = vmatpush1.xpose.msra.mxu0 %v222
    %557 = vmatprep.subr.mxu0 0.0
    %558 = vmatpush1.xpose.msra.mxu0 %v225
    %559 = vmatprep.subr.mxu0 0.0
    %560 = vmatpush1.xpose.msra.mxu0 %v228
    %561 = vmatprep.subr.mxu0 0.0
    %562 = vmatpush1.xpose.msra.mxu0 %v231
    %563 = vmatprep.subr.mxu0 0.0
    %564 = vmatpush1.xpose.msra.mxu0 %v234
    %565 = vmatprep.subr.mxu0 0.0
    %566 = vmatpush1.xpose.msra.mxu0 %v237
    %567 = vmatprep.subr.mxu0 0.0
    %568 = vmatpush1.xpose.msra.mxu0 %v240
    %569 = vmatprep.subr.mxu0 0.0
    %570 = vmatpush1.xpose.msra.mxu0 %v243
    %571 = vmatprep.subr.mxu0 0.0
    %572 = vmatpush1.xpose.msra.mxu0 0.0
    %573 = vmatprep.subr.mxu0 0.0
    %574 = vmatpush1.xpose.msra.mxu0 0.0
    %575 = vmatprep.subr.mxu0 0.0
    %576 = vmatpush1.xpose.msra.mxu0 0.0
    %577 = vmatprep.subr.mxu0 0.0
    %578 = vmatpush1.xpose.msra.mxu0 0.0
    %579 = vmatprep.subr.mxu0 0.0
    %580 = vmatpush1.xpose.msra.mxu0 0.0
    %581 = vmatprep.subr.mxu0 0.0
    %582 = vmatpush1.xpose.msra.mxu0 0.0
    %583 = vmatprep.subr.mxu0 0.0
    %584 = vmatpush1.xpose.msra.mxu0 0.0
    %585 = vmatprep.subr.mxu0 0.0
    %586 = vmatpush1.xpose.msra.mxu0 0.0
    %587 = vmatprep.subr.mxu0 0.0
    %588 = vmatpush1.xpose.msra.mxu0 0.0
    %589 = vmatprep.subr.mxu0 0.0
    %590 = vmatpush1.xpose.msra.mxu0 0.0
    %591 = vmatprep.subr.mxu0 0.0
    %592 = vmatpush1.xpose.msra.mxu0 0.0
    %593 = vmatprep.subr.mxu0 0.0
    %594 = vmatpush1.xpose.msra.mxu0 0.0
    %595 = vmatprep.subr.mxu0 0.0
    %596 = vmatpush1.xpose.msra.mxu0 0.0
    %597 = vmatprep.subr.mxu0 0.0
    %598 = vmatpush1.xpose.msra.mxu0 0.0
    %599 = vmatprep.subr.mxu0 0.0
    %600 = vmatpush1.xpose.msra.mxu0 0.0
    %601 = vmatprep.subr.mxu0 0.0
    %602 = vmatpush1.xpose.msra.mxu0 0.0
    %603 = vmatprep.mubr.f32.mxu0 0.0
    %604 = vmatmul.mubr.f32.gmra.mrb[0].mxu0 %v537
    %v605 = vpop.f32.mrb[0].mxu0
    %v606 = vadd.f32 0.0, %v605
    %v607 = vpop.f32.mrb[0].mxu0
    %608 = vdwg.mxu0
    %v609 = vadd.f32 %v533, %v606
    %v610 = vmul.f32 %v609, %v191
    %v611 = vtanh.pop %v610
    %v612 = vmul.f32 %v611, 0.5
    %v613 = vadd.f32 %v612, 0.5
    %v614 = vmul.f32 %v613, %v526
    %616 = vrot.lane.b32.xlu0 %v611, 64
    %v617 = vpop.permute.xlu0 %616
    %v619 = vmul.f32 %v613, %v617
    %621 = vrot.lane.b32.xlu0 %v619, 32
    %v622 = vpop.permute.xlu0 %621
    %v624 = vadd.f32 %v614, %v622
    %v625 = vtanh.pop %v624
    %627 = vrot.lane.b32.xlu0 %v625, 64
    %v628 = vpop.permute.xlu0 %627
    %v630 = vmul.f32 %v613, %v628
    %v631 = vld [vmem:[#allocation2 + $0x4] sm:$0x1]
    %633 = vrot.lane.b32.xlu0 %v630, 32
    %v634 = vpop.permute.xlu0 %633
    %v635 = vsel %vm193, %v634, 0
    %637 = vmatprep.subr.mxu0 0.0
    %638 = vmatpush1.xpose.msra.mxu0 %v198
    %639 = vmatprep.subr.mxu0 0.0
    %640 = vmatpush1.xpose.msra.mxu0 %v201
    %641 = vmatprep.subr.mxu0 0.0
    %642 = vmatpush1.xpose.msra.mxu0 %v204
    %643 = vmatprep.subr.mxu0 0.0
    %644 = vmatpush1.xpose.msra.mxu0 %v207
    %645 = vmatprep.subr.mxu0 0.0
    %646 = vmatpush1.xpose.msra.mxu0 %v210
    %647 = vmatprep.subr.mxu0 0.0
    %648 = vmatpush1.xpose.msra.mxu0 %v213
    %649 = vmatprep.subr.mxu0 0.0
    %650 = vmatpush1.xpose.msra.mxu0 %v216
    %651 = vmatprep.subr.mxu0 0.0
    %652 = vmatpush1.xpose.msra.mxu0 %v219
    %653 = vmatprep.subr.mxu0 0.0
    %654 = vmatpush1.xpose.msra.mxu0 %v222
    %655 = vmatprep.subr.mxu0 0.0
    %656 = vmatpush1.xpose.msra.mxu0 %v225
    %657 = vmatprep.subr.mxu0 0.0
    %658 = vmatpush1.xpose.msra.mxu0 %v228
    %659 = vmatprep.subr.mxu0 0.0
    %660 = vmatpush1.xpose.msra.mxu0 %v231
    %661 = vmatprep.subr.mxu0 0.0
    %662 = vmatpush1.xpose.msra.mxu0 %v234
    %663 = vmatprep.subr.mxu0 0.0
    %664 = vmatpush1.xpose.msra.mxu0 %v237
    %665 = vmatprep.subr.mxu0 0.0
    %666 = vmatpush1.xpose.msra.mxu0 %v240
    %667 = vmatprep.subr.mxu0 0.0
    %668 = vmatpush1.xpose.msra.mxu0 %v243
    %669 = vmatprep.subr.mxu0 0.0
    %670 = vmatpush1.xpose.msra.mxu0 0.0
    %671 = vmatprep.subr.mxu0 0.0
    %672 = vmatpush1.xpose.msra.mxu0 0.0
    %673 = vmatprep.subr.mxu0 0.0
    %674 = vmatpush1.xpose.msra.mxu0 0.0
    %675 = vmatprep.subr.mxu0 0.0
    %676 = vmatpush1.xpose.msra.mxu0 0.0
    %677 = vmatprep.subr.mxu0 0.0
    %678 = vmatpush1.xpose.msra.mxu0 0.0
    %679 = vmatprep.subr.mxu0 0.0
    %680 = vmatpush1.xpose.msra.mxu0 0.0
    %681 = vmatprep.subr.mxu0 0.0
    %682 = vmatpush1.xpose.msra.mxu0 0.0
    %683 = vmatprep.subr.mxu0 0.0
    %684 = vmatpush1.xpose.msra.mxu0 0.0
    %685 = vmatprep.subr.mxu0 0.0
    %686 = vmatpush1.xpose.msra.mxu0 0.0
    %687 = vmatprep.subr.mxu0 0.0
    %688 = vmatpush1.xpose.msra.mxu0 0.0
    %689 = vmatprep.subr.mxu0 0.0
    %690 = vmatpush1.xpose.msra.mxu0 0.0
    %691 = vmatprep.subr.mxu0 0.0
    %692 = vmatpush1.xpose.msra.mxu0 0.0
    %693 = vmatprep.subr.mxu0 0.0
    %694 = vmatpush1.xpose.msra.mxu0 0.0
    %695 = vmatprep.subr.mxu0 0.0
    %696 = vmatpush1.xpose.msra.mxu0 0.0
    %697 = vmatprep.subr.mxu0 0.0
    %698 = vmatpush1.xpose.msra.mxu0 0.0
    %699 = vmatprep.subr.mxu0 0.0
    %700 = vmatpush1.xpose.msra.mxu0 0.0
    %701 = vmatprep.mubr.f32.mxu0 0.0
    %702 = vmatmul.mubr.f32.gmra.mrb[0].mxu0 %v635
    %v703 = vpop.f32.mrb[0].mxu0
    %v704 = vadd.f32 0.0, %v703
    %v705 = vpop.f32.mrb[0].mxu0
    %706 = vdwg.mxu0
    %v707 = vadd.f32 %v631, %v704
    %v708 = vmul.f32 %v707, %v191
    %v709 = vtanh.pop %v708
    %v710 = vmul.f32 %v709, 0.5
    %v711 = vadd.f32 %v710, 0.5
    %v712 = vmul.f32 %v711, %v624
    %714 = vrot.lane.b32.xlu0 %v709, 64
    %v715 = vpop.permute.xlu0 %714
    %v717 = vmul.f32 %v711, %v715
    %719 = vrot.lane.b32.xlu0 %v717, 32
    %v720 = vpop.permute.xlu0 %719
    %v722 = vadd.f32 %v712, %v720
    %v723 = vtanh.pop %v722
    %725 = vrot.lane.b32.xlu0 %v723, 64
    %v726 = vpop.permute.xlu0 %725
    %v728 = vmul.f32 %v711, %v726
    %v729 = vld [vmem:[#allocation2 + $0x5] sm:$0x1]
    %731 = vrot.lane.b32.xlu0 %v728, 32
    %v732 = vpop.permute.xlu0 %731
    %v733 = vsel %vm193, %v732, 0
    %735 = vmatprep.subr.mxu0 0.0
    %736 = vmatpush1.xpose.msra.mxu0 %v198
    %737 = vmatprep.subr.mxu0 0.0
    %738 = vmatpush1.xpose.msra.mxu0 %v201
    %739 = vmatprep.subr.mxu0 0.0
    %740 = vmatpush1.xpose.msra.mxu0 %v204
    %741 = vmatprep.subr.mxu0 0.0
    %742 = vmatpush1.xpose.msra.mxu0 %v207
    %743 = vmatprep.subr.mxu0 0.0
    %744 = vmatpush1.xpose.msra.mxu0 %v210
    %745 = vmatprep.subr.mxu0 0.0
    %746 = vmatpush1.xpose.msra.mxu0 %v213
    %747 = vmatprep.subr.mxu0 0.0
    %748 = vmatpush1.xpose.msra.mxu0 %v216
    %749 = vmatprep.subr.mxu0 0.0
    %750 = vmatpush1.xpose.msra.mxu0 %v219
    %751 = vmatprep.subr.mxu0 0.0
    %752 = vmatpush1.xpose.msra.mxu0 %v222
    %753 = vmatprep.subr.mxu0 0.0
    %754 = vmatpush1.xpose.msra.mxu0 %v225
    %755 = vmatprep.subr.mxu0 0.0
    %756 = vmatpush1.xpose.msra.mxu0 %v228
    %757 = vmatprep.subr.mxu0 0.0
    %758 = vmatpush1.xpose.msra.mxu0 %v231
    %759 = vmatprep.subr.mxu0 0.0
    %760 = vmatpush1.xpose.msra.mxu0 %v234
    %761 = vmatprep.subr.mxu0 0.0
    %762 = vmatpush1.xpose.msra.mxu0 %v237
    %763 = vmatprep.subr.mxu0 0.0
    %764 = vmatpush1.xpose.msra.mxu0 %v240
    %765 = vmatprep.subr.mxu0 0.0
    %766 = vmatpush1.xpose.msra.mxu0 %v243
    %767 = vmatprep.subr.mxu0 0.0
    %768 = vmatpush1.xpose.msra.mxu0 0.0
    %769 = vmatprep.subr.mxu0 0.0
    %770 = vmatpush1.xpose.msra.mxu0 0.0
    %771 = vmatprep.subr.mxu0 0.0
    %772 = vmatpush1.xpose.msra.mxu0 0.0
    %773 = vmatprep.subr.mxu0 0.0
    %774 = vmatpush1.xpose.msra.mxu0 0.0
    %775 = vmatprep.subr.mxu0 0.0
    %776 = vmatpush1.xpose.msra.mxu0 0.0
    %777 = vmatprep.subr.mxu0 0.0
    %778 = vmatpush1.xpose.msra.mxu0 0.0
    %779 = vmatprep.subr.mxu0 0.0
    %780 = vmatpush1.xpose.msra.mxu0 0.0
    %781 = vmatprep.subr.mxu0 0.0
    %782 = vmatpush1.xpose.msra.mxu0 0.0
    %783 = vmatprep.subr.mxu0 0.0
    %784 = vmatpush1.xpose.msra.mxu0 0.0
    %785 = vmatprep.subr.mxu0 0.0
    %786 = vmatpush1.xpose.msra.mxu0 0.0
    %787 = vmatprep.subr.mxu0 0.0
    %788 = vmatpush1.xpose.msra.mxu0 0.0
    %789 = vmatprep.subr.mxu0 0.0
    %790 = vmatpush1.xpose.msra.mxu0 0.0
    %791 = vmatprep.subr.mxu0 0.0
    %792 = vmatpush1.xpose.msra.mxu0 0.0
    %793 = vmatprep.subr.mxu0 0.0
    %794 = vmatpush1.xpose.msra.mxu0 0.0
    %795 = vmatprep.subr.mxu0 0.0
    %796 = vmatpush1.xpose.msra.mxu0 0.0
    %797 = vmatprep.subr.mxu0 0.0
    %798 = vmatpush1.xpose.msra.mxu0 0.0
    %799 = vmatprep.mubr.f32.mxu0 0.0
    %800 = vmatmul.mubr.f32.gmra.mrb[0].mxu0 %v733
    %v801 = vpop.f32.mrb[0].mxu0
    %v802 = vadd.f32 0.0, %v801
    %v803 = vpop.f32.mrb[0].mxu0
    %804 = vdwg.mxu0
    %v805 = vadd.f32 %v729, %v802
    %v806 = vmul.f32 %v805, %v191
    %v807 = vtanh.pop %v806
    %v808 = vmul.f32 %v807, 0.5
    %v809 = vadd.f32 %v808, 0.5
    %v810 = vmul.f32 %v809, %v722
    %812 = vrot.lane.b32.xlu0 %v807, 64
    %v813 = vpop.permute.xlu0 %812
    %v815 = vmul.f32 %v809, %v813
    %817 = vrot.lane.b32.xlu0 %v815, 32
    %v818 = vpop.permute.xlu0 %817
    %v820 = vadd.f32 %v810, %v818
    %v821 = vtanh.pop %v820
    %823 = vrot.lane.b32.xlu0 %v821, 64
    %v824 = vpop.permute.xlu0 %823
    %v826 = vmul.f32 %v809, %v824
    %v827 = vld [vmem:[#allocation2 + $0x6] sm:$0x1]
    %829 = vrot.lane.b32.xlu0 %v826, 32
    %v830 = vpop.permute.xlu0 %829
    %v831 = vsel %vm193, %v830, 0
    %833 = vmatprep.subr.mxu0 0.0
    %834 = vmatpush1.xpose.msra.mxu0 %v198
    %835 = vmatprep.subr.mxu0 0.0
    %836 = vmatpush1.xpose.msra.mxu0 %v201
    %837 = vmatprep.subr.mxu0 0.0
    %838 = vmatpush1.xpose.msra.mxu0 %v204
    %839 = vmatprep.subr.mxu0 0.0
    %840 = vmatpush1.xpose.msra.mxu0 %v207
    %841 = vmatprep.subr.mxu0 0.0
    %842 = vmatpush1.xpose.msra.mxu0 %v210
    %843 = vmatprep.subr.mxu0 0.0
    %844 = vmatpush1.xpose.msra.mxu0 %v213
    %845 = vmatprep.subr.mxu0 0.0
    %846 = vmatpush1.xpose.msra.mxu0 %v216
    %847 = vmatprep.subr.mxu0 0.0
    %848 = vmatpush1.xpose.msra.mxu0 %v219
    %849 = vmatprep.subr.mxu0 0.0
    %850 = vmatpush1.xpose.msra.mxu0 %v222
    %851 = vmatprep.subr.mxu0 0.0
    %852 = vmatpush1.xpose.msra.mxu0 %v225
    %853 = vmatprep.subr.mxu0 0.0
    %854 = vmatpush1.xpose.msra.mxu0 %v228
    %855 = vmatprep.subr.mxu0 0.0
    %856 = vmatpush1.xpose.msra.mxu0 %v231
    %857 = vmatprep.subr.mxu0 0.0
    %858 = vmatpush1.xpose.msra.mxu0 %v234
    %859 = vmatprep.subr.mxu0 0.0
    %860 = vmatpush1.xpose.msra.mxu0 %v237
    %861 = vmatprep.subr.mxu0 0.0
    %862 = vmatpush1.xpose.msra.mxu0 %v240
    %863 = vmatprep.subr.mxu0 0.0
    %864 = vmatpush1.xpose.msra.mxu0 %v243
    %865 = vmatprep.subr.mxu0 0.0
    %866 = vmatpush1.xpose.msra.mxu0 0.0
    %867 = vmatprep.subr.mxu0 0.0
    %868 = vmatpush1.xpose.msra.mxu0 0.0
    %869 = vmatprep.subr.mxu0 0.0
    %870 = vmatpush1.xpose.msra.mxu0 0.0
    %871 = vmatprep.subr.mxu0 0.0
    %872 = vmatpush1.xpose.msra.mxu0 0.0
    %873 = vmatprep.subr.mxu0 0.0
    %874 = vmatpush1.xpose.msra.mxu0 0.0
    %875 = vmatprep.subr.mxu0 0.0
    %876 = vmatpush1.xpose.msra.mxu0 0.0
    %877 = vmatprep.subr.mxu0 0.0
    %878 = vmatpush1.xpose.msra.mxu0 0.0
    %879 = vmatprep.subr.mxu0 0.0
    %880 = vmatpush1.xpose.msra.mxu0 0.0
    %881 = vmatprep.subr.mxu0 0.0
    %882 = vmatpush1.xpose.msra.mxu0 0.0
    %883 = vmatprep.subr.mxu0 0.0
    %884 = vmatpush1.xpose.msra.mxu0 0.0
    %885 = vmatprep.subr.mxu0 0.0
    %886 = vmatpush1.xpose.msra.mxu0 0.0
    %887 = vmatprep.subr.mxu0 0.0
    %888 = vmatpush1.xpose.msra.mxu0 0.0
    %889 = vmatprep.subr.mxu0 0.0
    %890 = vmatpush1.xpose.msra.mxu0 0.0
    %891 = vmatprep.subr.mxu0 0.0
    %892 = vmatpush1.xpose.msra.mxu0 0.0
    %893 = vmatprep.subr.mxu0 0.0
    %894 = vmatpush1.xpose.msra.mxu0 0.0
    %895 = vmatprep.subr.mxu0 0.0
    %896 = vmatpush1.xpose.msra.mxu0 0.0
    %897 = vmatprep.mubr.f32.mxu0 0.0
    %898 = vmatmul.mubr.f32.gmra.mrb[0].mxu0 %v831
    %v899 = vpop.f32.mrb[0].mxu0
    %v900 = vadd.f32 0.0, %v899
    %v901 = vpop.f32.mrb[0].mxu0
    %902 = vdwg.mxu0
    %v903 = vadd.f32 %v827, %v900
    %v904 = vmul.f32 %v903, %v191
    %v905 = vtanh.pop %v904
    %v906 = vmul.f32 %v905, 0.5
    %v907 = vadd.f32 %v906, 0.5
    %v908 = vmul.f32 %v907, %v820
    %910 = vrot.lane.b32.xlu0 %v905, 64
    %v911 = vpop.permute.xlu0 %910
    %v913 = vmul.f32 %v907, %v911
    %915 = vrot.lane.b32.xlu0 %v913, 32
    %v916 = vpop.permute.xlu0 %915
    %v918 = vadd.f32 %v908, %v916
    %v919 = vtanh.pop %v918
    %921 = vrot.lane.b32.xlu0 %v919, 64
    %v922 = vpop.permute.xlu0 %921
    %v924 = vmul.f32 %v907, %v922
    %v925 = vld [vmem:[#allocation2 + $0x7] sm:$0x1]
    %927 = vrot.lane.b32.xlu0 %v924, 32
    %v928 = vpop.permute.xlu0 %927
    %v929 = vsel %vm193, %v928, 0
    %931 = vmatprep.subr.mxu0 0.0
    %932 = vmatpush1.xpose.msra.mxu0 %v198
    %933 = vmatprep.subr.mxu0 0.0
    %934 = vmatpush1.xpose.msra.mxu0 %v201
    %935 = vmatprep.subr.mxu0 0.0
    %936 = vmatpush1.xpose.msra.mxu0 %v204
    %937 = vmatprep.subr.mxu0 0.0
    %938 = vmatpush1.xpose.msra.mxu0 %v207
    %939 = vmatprep.subr.mxu0 0.0
    %940 = vmatpush1.xpose.msra.mxu0 %v210
    %941 = vmatprep.subr.mxu0 0.0
    %942 = vmatpush1.xpose.msra.mxu0 %v213
    %943 = vmatprep.subr.mxu0 0.0
    %944 = vmatpush1.xpose.msra.mxu0 %v216
    %945 = vmatprep.subr.mxu0 0.0
    %946 = vmatpush1.xpose.msra.mxu0 %v219
    %947 = vmatprep.subr.mxu0 0.0
    %948 = vmatpush1.xpose.msra.mxu0 %v222
    %949 = vmatprep.subr.mxu0 0.0
    %950 = vmatpush1.xpose.msra.mxu0 %v225
    %951 = vmatprep.subr.mxu0 0.0
    %952 = vmatpush1.xpose.msra.mxu0 %v228
    %953 = vmatprep.subr.mxu0 0.0
    %954 = vmatpush1.xpose.msra.mxu0 %v231
    %955 = vmatprep.subr.mxu0 0.0
    %956 = vmatpush1.xpose.msra.mxu0 %v234
    %957 = vmatprep.subr.mxu0 0.0
    %958 = vmatpush1.xpose.msra.mxu0 %v237
    %959 = vmatprep.subr.mxu0 0.0
    %960 = vmatpush1.xpose.msra.mxu0 %v240
    %961 = vmatprep.subr.mxu0 0.0
    %962 = vmatpush1.xpose.msra.mxu0 %v243
    %963 = vmatprep.subr.mxu0 0.0
    %964 = vmatpush1.xpose.msra.mxu0 0.0
    %965 = vmatprep.subr.mxu0 0.0
    %966 = vmatpush1.xpose.msra.mxu0 0.0
    %967 = vmatprep.subr.mxu0 0.0
    %968 = vmatpush1.xpose.msra.mxu0 0.0
    %969 = vmatprep.subr.mxu0 0.0
    %970 = vmatpush1.xpose.msra.mxu0 0.0
    %971 = vmatprep.subr.mxu0 0.0
    %972 = vmatpush1.xpose.msra.mxu0 0.0
    %973 = vmatprep.subr.mxu0 0.0
    %974 = vmatpush1.xpose.msra.mxu0 0.0
    %975 = vmatprep.subr.mxu0 0.0
    %976 = vmatpush1.xpose.msra.mxu0 0.0
    %977 = vmatprep.subr.mxu0 0.0
    %978 = vmatpush1.xpose.msra.mxu0 0.0
    %979 = vmatprep.subr.mxu0 0.0
    %980 = vmatpush1.xpose.msra.mxu0 0.0
    %981 = vmatprep.subr.mxu0 0.0
    %982 = vmatpush1.xpose.msra.mxu0 0.0
    %983 = vmatprep.subr.mxu0 0.0
    %984 = vmatpush1.xpose.msra.mxu0 0.0
    %985 = vmatprep.subr.mxu0 0.0
    %986 = vmatpush1.xpose.msra.mxu0 0.0
    %987 = vmatprep.subr.mxu0 0.0
    %988 = vmatpush1.xpose.msra.mxu0 0.0
    %989 = vmatprep.subr.mxu0 0.0
    %990 = vmatpush1.xpose.msra.mxu0 0.0
    %991 = vmatprep.subr.mxu0 0.0
    %992 = vmatpush1.xpose.msra.mxu0 0.0
    %993 = vmatprep.subr.mxu0 0.0
    %994 = vmatpush1.xpose.msra.mxu0 0.0
    %995 = vmatprep.mubr.f32.mxu0 0.0
    %996 = vmatmul.mubr.f32.gmra.mrb[0].mxu0 %v929
    %v997 = vpop.f32.mrb[0].mxu0
    %v998 = vadd.f32 0.0, %v997
    %v999 = vpop.f32.mrb[0].mxu0
    %1000 = vdwg.mxu0
    %v1001 = vadd.f32 %v925, %v998
    %v1002 = vmul.f32 %v1001, %v191
    %v1003 = vtanh.pop %v1002
    %v1004 = vmul.f32 %v1003, 0.5
    %v1005 = vadd.f32 %v1004, 0.5
    %v1006 = vmul.f32 %v1005, %v918
    %1008 = vrot.lane.b32.xlu0 %v1003, 64
    %v1009 = vpop.permute.xlu0 %1008
    %v1011 = vmul.f32 %v1005, %v1009
    %1013 = vrot.lane.b32.xlu0 %v1011, 32
    %v1014 = vpop.permute.xlu0 %1013
    %v1016 = vadd.f32 %v1006, %v1014
    %v1017 = vtanh.pop %v1016
    %1019 = vrot.lane.b32.xlu0 %v1017, 64
    %v1020 = vpop.permute.xlu0 %1019
    %v1022 = vmul.f32 %v1005, %v1020
    %1024 = vrot.lane.b32.xlu0 %v1022, 32
    %v1025 = vpop.permute.xlu0 %1024
    %vm1027 = vcmask 253952
    %1028 = vst.msk [vmem:[#allocation3] sm:$0x1] %vm1027, %v1025
    // Predicated region
    $region22: #{tpu_custom_call.1} parent=1 // pred_check
      _
    $region23: #{tpu_custom_call.1} parent=1 // pred_check_branch
      %1030 = sbr.rel (0) target = $region25
    $region24: #{tpu_custom_call.1} parent=1 // pred_region
      %s1032 = ssub.s32 16, 16
      %1033 = vsyncadd [#allocation4], %s1032
      %s1035 = sshll.u32 [#allocation3], 4
      %s1036 = int_to_ptr.vmem [resolvable:$true] %s1035
      %1038 = dma.vmem_to_hbm [thread:$0]  %s1036, 16, %s5, [#allocation4]
    $region25: #{tpu_custom_call.1} parent=1 // pred_fallthru
      _
    // Predicated region
    $region26: #{tpu_custom_call.1} parent=1 // pred_check
      _
    $region27: #{tpu_custom_call.1} parent=1 // pred_check_branch
      %1040 = sbr.rel (0) target = $region29
    $region28: #{tpu_custom_call.1} parent=1 // pred_region
      %1041 = dma.done [#allocation4], 16
    $region29: #{tpu_custom_call.1} parent=1 // pred_fallthru
      _
    %1042 = vsyncpa [#allocation4], 1

</llo_original>
